<compile_context>
chip_gen: v5e
topology: v5e:2x2
jax: 0.10.0
libtpu: 0.0.40
codegen_flags: <defaults>
</compile_context>

<pallas_src>
import jax
import jax.numpy as jnp
from jax.experimental import pallas as pl
from jax.experimental.pallas import tpu as pltpu

LANE = 128
SUBLANE = 8


def _round_up(x, m):
    return (x + m - 1) // m * m


# ---------------------------------------------------------------------------
# Fused Pallas kernel
# ---------------------------------------------------------------------------
# grid = (2 layers, n_tiles node-row tiles), sequential ("arbitrary") on both
# axes: layer 1 consumes the staged operand built tile-by-tile during layer 0,
# and the pooled sum is a running reduction over node tiles.

def _fused_gcn_kernel(adj_ref, xw1_ref, dis_ref, bias_ref, w2_ref,
                      pool_ref, invc_ref, wlin_ref, blin_ref, out_ref,
                      xw2_ref, pooled_ref):
    layer = pl.program_id(0)
    t = pl.program_id(1)
    n_tiles = pl.num_programs(1)
    tm = adj_ref.shape[0]

    dis = dis_ref[...]          # (tm, 1) f32 row scales D^{-1/2}
    bias = bias_ref[0]          # (1, H_pad) f32, selected by layer grid axis

    # ---------------- layer 0: aggregate + relu + stage layer-1 operand -----
    @pl.when(layer == 0)
    def _():
        @pl.when(t == 0)
        def _():
            pooled_ref[...] = jnp.zeros_like(pooled_ref)

        # C[tile, :] @ (D^{-1/2} X W1)   -- bf16 x bf16, f32 MXU accumulation
        agg = jnp.dot(adj_ref[...], xw1_ref[...],
                      preferred_element_type=jnp.float32)
        h1 = jnp.maximum(dis * agg + bias, 0.0)            # (tm, H_pad) f32

        # stage this tile's slice of the layer-1 operand: s * (h1 @ W2)
        xw2 = jnp.dot(h1, w2_ref[...], preferred_element_type=jnp.float32)
        start = pl.multiple_of(t * tm, tm)
        xw2_ref[pl.ds(start, tm), :] = (dis * xw2).astype(xw2_ref.dtype)

    # ---------------- layer 1: aggregate + relu + pooled sum + epilogue -----
    @pl.when(layer == 1)
    def _():
        agg = jnp.dot(adj_ref[...], xw2_ref[...],
                      preferred_element_type=jnp.float32)
        h2 = jnp.maximum(dis * agg + bias, 0.0)            # (tm, H_pad) f32

        # global_mean_pool contribution of this node tile (bf16 MXU path);
        # the 1/count mean scale is applied once in the epilogue.
        pooled_ref[...] += jnp.dot(pool_ref[...], h2.astype(jnp.bfloat16),
                                   preferred_element_type=jnp.float32)

        @pl.when(t == n_tiles - 1)
        def _():
            pooled = pooled_ref[...] * invc_ref[...]        # mean
            out = jnp.dot(pooled, wlin_ref[...],
                          preferred_element_type=jnp.float32) + blin_ref[...]
            out_ref[...] = out.astype(out_ref.dtype)


# ---------------------------------------------------------------------------
# Graph-structure glue (plain JAX)
# ---------------------------------------------------------------------------

def adjacency_counts(edge_index, num_nodes):
    """Dense C = A + I edge counts (f32; small integers)."""
    src, dst = edge_index[0], edge_index[1]
    loop = jnp.arange(num_nodes, dtype=src.dtype)
    src = jnp.concatenate([src, loop])
    dst = jnp.concatenate([dst, loop])
    ones = jnp.ones_like(src, dtype=jnp.float32)
    return jnp.zeros((num_nodes, num_nodes), jnp.float32).at[dst, src].add(ones)


def gcn_normalized_adjacency(edge_index, num_nodes):
    """Â = D^{-1/2}(A + I)D^{-1/2} (reference path only)."""
    counts = adjacency_counts(edge_index, num_nodes)
    deg = jnp.sum(counts, axis=1)
    d_is = jnp.where(deg > 0, 1.0 / jnp.sqrt(deg), 0.0)
    return d_is[:, None] * counts * d_is[None, :]


def mean_pool_matrix(batch, num_graphs, num_nodes):
    """P[g, n] = 1/count[g] if batch[n] == g (reference path only)."""
    onehot = (batch[None, :] == jnp.arange(num_graphs)[:, None]).astype(jnp.float32)
    cnt = jnp.maximum(jnp.sum(onehot, axis=1, keepdims=True), 1.0)
    return onehot / cnt


def _vmem_limit_bytes():
    # Per-generation VMEM budget (leave headroom for the compiler's own use).
    try:
        cap = pltpu.get_tpu_info().vmem_capacity_bytes
        return int(cap * 3 // 4)          # 96 MiB on v5e/v6e, 48 MiB on v7x
    except Exception:
        return 48 * 1024 * 1024


# ---------------------------------------------------------------------------
# Forward pass (single fused pallas_call)
# ---------------------------------------------------------------------------

def gcn_forward(params, x, edge_index, batch, num_graphs, *, row_tile=512):
    assert row_tile % LANE == 0
    n, f_in = x.shape
    hidden = params["w1"].shape[1]
    out_dim = params["w_lin"].shape[1]

    # lane-dense padded shapes
    h_p = _round_up(hidden, LANE)
    o_p = _round_up(out_dim, LANE)
    g_p = _round_up(num_graphs, SUBLANE)

    # node-row tiling: n_p is a multiple of 128 so every operand stays
    # lane-dense; tm == n_p for moderate graphs keeps the counts matrix fully
    # resident in VMEM (no re-stream for layer 1).
    n128 = _round_up(n, LANE)
    if n128 <= row_tile:
        tm = n128
        n_p = n128
    else:
        tm = row_tile
        n_p = _round_up(n, tm)
    n_tiles = n_p // tm

    # --- glue: raw (A+I) counts (exact in bf16) + factored normalization ----
    counts = adjacency_counts(edge_index, n)
    deg = jnp.sum(counts, axis=1)
    d_is = jnp.where(deg > 0, 1.0 / jnp.sqrt(deg), 0.0)          # D^{-1/2}

    counts_p = (jnp.zeros((n_p, n_p), jnp.float32)
                .at[:n, :n].set(counts).astype(jnp.bfloat16))
    dis_p = jnp.zeros((n_p, 1), jnp.float32).at[:n, 0].set(d_is)

    # layer-0 staged operand, hoisted out of the kernel: D^{-1/2} (X W1)
    xw1s = d_is[:, None] * (x @ params["w1"])
    xw1s_p = (jnp.zeros((n_p, h_p), jnp.float32)
              .at[:n, :hidden].set(xw1s).astype(jnp.bfloat16))

    # stacked biases (indexed by the layer grid axis)
    bias_p = jnp.zeros((2, 1, h_p), jnp.float32)
    bias_p = bias_p.at[0, 0, :hidden].set(params["b1"].reshape(-1))
    bias_p = bias_p.at[1, 0, :hidden].set(params["b2"].reshape(-1))

    w2_p = jnp.zeros((h_p, h_p), jnp.float32).at[:hidden, :hidden].set(params["w2"])
    wl_p = jnp.zeros((h_p, o_p), jnp.float32).at[:hidden, :out_dim].set(params["w_lin"])
    bl_p = jnp.zeros((1, o_p), jnp.float32).at[:, :out_dim].set(params["b_lin"])

    # exact one-hot pool matrix in bf16; mean scale applied in the epilogue
    onehot = (batch[None, :] == jnp.arange(num_graphs)[:, None]).astype(jnp.float32)
    gcnt = jnp.maximum(jnp.sum(onehot, axis=1), 1.0)
    pool_p = (jnp.zeros((g_p, n_p), jnp.float32)
              .at[:num_graphs, :n].set(onehot).astype(jnp.bfloat16))
    invc_p = jnp.zeros((g_p, 1), jnp.float32).at[:num_graphs, 0].set(1.0 / gcnt)

    flops = int(2 * 2 * n_p * n_p * h_p          # two aggregations
                + 2 * n_p * h_p * h_p            # h1 @ W2 staging
                + 2 * g_p * n_p * h_p            # mean pool
                + 2 * g_p * h_p * o_p)           # final linear
    bytes_accessed = int(2 * n_p * n_p * 2       # counts streamed once/layer
                         + n_p * h_p * 2         # xw1s (resident)
                         + g_p * n_p * 2 + g_p * tm * 2   # pool tiles
                         + 2 * n_p * 4           # d^{-1/2} tiles (both layers)
                         + h_p * h_p * 4 + h_p * o_p * 4
                         + 2 * h_p * 4 + o_p * 4
                         + g_p * o_p * 4)        # output

    out_p = pl.pallas_call(
        _fused_gcn_kernel,
        out_shape=jax.ShapeDtypeStruct((g_p, o_p), jnp.float32),
        grid=(2, n_tiles),
        in_specs=[
            pl.BlockSpec((tm, n_p), lambda l, t: (t, 0)),        # (A+I) counts (bf16)
            pl.BlockSpec((n_p, h_p), lambda l, t: (0, 0)),       # xw1s (bf16, resident)
            pl.BlockSpec((tm, 1), lambda l, t: (t, 0)),          # D^{-1/2} row tile
            pl.BlockSpec((1, 1, h_p), lambda l, t: (l, 0, 0)),   # bias[layer]
            pl.BlockSpec((h_p, h_p), lambda l, t: (0, 0)),       # W2
            pl.BlockSpec((g_p, tm), lambda l, t: (0, l * t)),    # pool one-hot tile
            pl.BlockSpec((g_p, 1), lambda l, t: (0, 0)),         # 1/graph-count
            pl.BlockSpec((h_p, o_p), lambda l, t: (0, 0)),       # W_lin
            pl.BlockSpec((1, o_p), lambda l, t: (0, 0)),         # b_lin
        ],
        out_specs=pl.BlockSpec((g_p, o_p), lambda l, t: (0, 0)),
        scratch_shapes=[
            pltpu.VMEM((n_p, h_p), jnp.bfloat16),   # staged layer-1 operand
            pltpu.VMEM((g_p, h_p), jnp.float32),    # pooled-sum accumulator
        ],
        compiler_params=pltpu.CompilerParams(
            dimension_semantics=("arbitrary", "arbitrary"),
            vmem_limit_bytes=_vmem_limit_bytes(),
        ),
        cost_estimate=pl.CostEstimate(
            flops=flops, transcendentals=0, bytes_accessed=bytes_accessed),
    )(counts_p, xw1s_p, dis_p, bias_p, w2_p, pool_p, invc_p, wl_p, bl_p)

    return out_p[:num_graphs, :out_dim]


def gcn_reference(params, x, edge_index, batch, num_graphs):
    """Pure-JAX f32 reference of the same forward (for a sanity check)."""
    n = x.shape[0]
    adj = gcn_normalized_adjacency(edge_index, n)
    pool = mean_pool_matrix(batch, num_graphs, n)
    h = jnp.maximum(adj @ (x @ params["w1"]) + params["b1"], 0.0)
    h = jnp.maximum(adj @ (h @ params["w2"]) + params["b2"], 0.0)
    return (pool @ h) @ params["w_lin"] + params["b_lin"]


# ---------------------------------------------------------------------------
# Parameter init (matches torch defaults closely enough for a demo)
# ---------------------------------------------------------------------------

def init_gcn_params(key, input_dim, hidden_dim, output_dim):
    k1, k2, k3, k4 = jax.random.split(key, 4)

    def glorot(k, fan_in, fan_out):
        lim = jnp.sqrt(6.0 / (fan_in + fan_out))
        return jax.random.uniform(k, (fan_in, fan_out), jnp.float32, -lim, lim)

    return {
        "w1": glorot(k1, input_dim, hidden_dim),
        "b1": jnp.zeros((1, hidden_dim), jnp.float32),
        "w2": glorot(k2, hidden_dim, hidden_dim),
        "b2": jnp.zeros((1, hidden_dim), jnp.float32),
        "w_lin": jax.random.uniform(k3, (hidden_dim, output_dim), jnp.float32,
                                    -1.0 / jnp.sqrt(hidden_dim),
                                    1.0 / jnp.sqrt(hidden_dim)),
        "b_lin": jax.random.uniform(k4, (1, output_dim), jnp.float32,
                                    -1.0 / jnp.sqrt(hidden_dim),
                                    1.0 / jnp.sqrt(hidden_dim)),
    }


# ---------------------------------------------------------------------------
# Main
# ---------------------------------------------------------------------------

if __name__ == "__main__":
    key = jax.random.PRNGKey(0)
    k_x, k_e, k_p = jax.random.split(key, 3)

    # Small synthetic batched graph: 2 graphs x 8 nodes = 16 nodes.
    num_nodes = 16
    num_graphs = 2
    input_dim, hidden_dim, output_dim = 8, 32, 4

    x = jax.random.normal(k_x, (num_nodes, input_dim), jnp.float32)

    # Random undirected edges within each graph.
    n_edges_per_graph = 12
    e0 = jax.random.randint(k_e, (2, n_edges_per_graph), 0, 8)
    e1 = jax.random.randint(jax.random.fold_in(k_e, 1),
                            (2, n_edges_per_graph), 0, 8) + 8
    edge_index = jnp.concatenate(
        [e0, e0[::-1], e1, e1[::-1]], axis=1).astype(jnp.int32)

    batch = jnp.concatenate([jnp.zeros(8, jnp.int32), jnp.ones(8, jnp.int32)])

    params = init_gcn_params(k_p, input_dim, hidden_dim, output_dim)

    fwd = jax.jit(gcn_forward, static_argnums=(4,))
    out = jax.block_until_ready(fwd(params, x, edge_index, batch, num_graphs))
    assert out.shape == (num_graphs, output_dim)

    # Sanity check against f32 reference (bf16 staged operands -> ~0.4% rel).
    ref = gcn_reference(params, x, edge_index, batch, num_graphs)
    max_err = float(jnp.max(jnp.abs(out - ref)))
    assert max_err < 5e-2, f"max abs err too large: {max_err}"

    print("KERNEL_OK")
</pallas_src>

<mosaic_0001>
module attributes {stable_mosaic.version = 11 : i64} {
  func.func @_fused_gcn_kernel(%arg0: i32, %arg1: i32, %arg2: memref<128x128xbf16, #tpu.memory_space<vmem>>, %arg3: memref<128x128xbf16, #tpu.memory_space<vmem>>, %arg4: memref<128x1xf32, #tpu.memory_space<vmem>>, %arg5: memref<1x1x128xf32, #tpu.memory_space<vmem>>, %arg6: memref<128x128xf32, #tpu.memory_space<vmem>>, %arg7: memref<8x128xbf16, #tpu.memory_space<vmem>>, %arg8: memref<8x1xf32, #tpu.memory_space<vmem>>, %arg9: memref<128x128xf32, #tpu.memory_space<vmem>>, %arg10: memref<1x128xf32, #tpu.memory_space<vmem>>, %arg11: memref<8x128xf32, #tpu.memory_space<vmem>>, %arg12: memref<128x128xbf16, #tpu.memory_space<vmem>>, %arg13: memref<8x128xf32, #tpu.memory_space<vmem>>) attributes {dimension_semantics = [#tpu.dimension_semantics<arbitrary>, #tpu.dimension_semantics<arbitrary>], iteration_bounds = array<i64: 2, 1>, scalar_prefetch = 0 : i64, scratch_operands = 2 : i64, tpu.core_type = #tpu.core_type<tc>, window_params = [{transform_indices = @transform_0, window_bounds = array<i64: 128, 128>}, {pipeline_mode = #tpu.pipeline_mode<synchronous>, transform_indices = @transform_1, window_bounds = array<i64: 128, 128>}, {transform_indices = @transform_2, window_bounds = array<i64: 128, 1>}, {transform_indices = @transform_3, window_bounds = array<i64: 1, 1, 128>}, {pipeline_mode = #tpu.pipeline_mode<synchronous>, transform_indices = @transform_4, window_bounds = array<i64: 128, 128>}, {transform_indices = @transform_5, window_bounds = array<i64: 8, 128>}, {pipeline_mode = #tpu.pipeline_mode<synchronous>, transform_indices = @transform_6, window_bounds = array<i64: 8, 1>}, {pipeline_mode = #tpu.pipeline_mode<synchronous>, transform_indices = @transform_7, window_bounds = array<i64: 128, 128>}, {pipeline_mode = #tpu.pipeline_mode<synchronous>, transform_indices = @transform_8, window_bounds = array<i64: 1, 128>}, {pipeline_mode = #tpu.pipeline_mode<synchronous>, transform_indices = @transform_9, window_bounds = array<i64: 8, 128>}]} {
    %c0 = arith.constant 0 : index
    %c0_0 = arith.constant 0 : index
    %0 = vector.load %arg4[%c0, %c0_0] : memref<128x1xf32, #tpu.memory_space<vmem>>, vector<128x1xf32>
    %c0_1 = arith.constant 0 : index
    %c0_2 = arith.constant 0 : index
    %c0_3 = arith.constant 0 : index
    %1 = vector.load %arg5[%c0_1, %c0_2, %c0_3] : memref<1x1x128xf32, #tpu.memory_space<vmem>>, vector<1x1x128xf32>
    %2 = vector.shape_cast %1 : vector<1x1x128xf32> to vector<1x128xf32>
    %c0_i32 = arith.constant 0 : i32
    %3 = arith.cmpi eq, %arg0, %c0_i32 : i32
    %4 = arith.extui %3 : i1 to i32
    %c0_i32_4 = arith.constant 0 : i32
    %5 = arith.cmpi ne, %4, %c0_i32_4 : i32
    scf.if %5 {
      %c0_i32_6 = arith.constant 0 : i32
      %9 = arith.cmpi eq, %arg1, %c0_i32_6 : i32
      %10 = arith.extui %9 : i1 to i32
      %c0_i32_7 = arith.constant 0 : i32
      %11 = arith.cmpi ne, %10, %c0_i32_7 : i32
      scf.if %11 {
        %cst_17 = arith.constant 0.000000e+00 : f32
        %30 = vector.broadcast %cst_17 : f32 to vector<8x128xf32>
        %c0_18 = arith.constant 0 : index
        %c0_19 = arith.constant 0 : index
        %31 = vector.load %arg13[%c0_18, %c0_19] : memref<8x128xf32, #tpu.memory_space<vmem>>, vector<8x128xf32>
        tpu.vector_store %arg13[%c0_18, %c0_19], %30 {strides = array<i32>} : memref<8x128xf32, #tpu.memory_space<vmem>>, vector<8x128xf32>,
      } else {
      }
      %c0_8 = arith.constant 0 : index
      %c0_9 = arith.constant 0 : index
      %12 = vector.load %arg2[%c0_8, %c0_9] : memref<128x128xbf16, #tpu.memory_space<vmem>>, vector<128x128xbf16>
      %c0_10 = arith.constant 0 : index
      %c0_11 = arith.constant 0 : index
      %13 = vector.load %arg3[%c0_10, %c0_11] : memref<128x128xbf16, #tpu.memory_space<vmem>>, vector<128x128xbf16>
      %cst = arith.constant dense<0.000000e+00> : vector<128x128xf32>
      %14 = tpu.matmul %12, %13, %cst {dimension_numbers = #tpu.dot_dimension_numbers<[1], [0], [0], [1], [0, 0, 1, 1], [], []>} : vector<128x128xbf16>, vector<128x128xbf16>, vector<128x128xf32> -> vector<128x128xf32>
      %15 = vector.broadcast %0 : vector<128x1xf32> to vector<128x128xf32>
      %16 = arith.mulf %15, %14 : vector<128x128xf32>
      %17 = vector.broadcast %2 : vector<1x128xf32> to vector<128x128xf32>
      %18 = arith.addf %16, %17 : vector<128x128xf32>
      %cst_12 = arith.constant 0.000000e+00 : f32
      %19 = vector.broadcast %cst_12 : f32 to vector<128x128xf32>
      %20 = arith.maximumf %18, %19 : vector<128x128xf32>
      %c0_13 = arith.constant 0 : index
      %c0_14 = arith.constant 0 : index
      %21 = vector.load %arg6[%c0_13, %c0_14] : memref<128x128xf32, #tpu.memory_space<vmem>>, vector<128x128xf32>
      %cst_15 = arith.constant dense<0.000000e+00> : vector<128x128xf32>
      %22 = tpu.matmul %20, %21, %cst_15 {dimension_numbers = #tpu.dot_dimension_numbers<[1], [0], [0], [1], [0, 0, 1, 1], [], []>} : vector<128x128xf32>, vector<128x128xf32>, vector<128x128xf32> -> vector<128x128xf32>
      %c128_i32 = arith.constant 128 : i32
      %23 = arith.muli %arg1, %c128_i32 : i32
      %24 = tpu.assume_multiple %23, 128 : i32
      %25 = vector.broadcast %0 : vector<128x1xf32> to vector<128x128xf32>
      %26 = arith.mulf %25, %22 : vector<128x128xf32>
      %27 = arith.truncf %26 : vector<128x128xf32> to vector<128x128xbf16>
      %28 = arith.index_cast %24 : i32 to index
      %c0_16 = arith.constant 0 : index
      %29 = vector.load %arg12[%28, %c0_16] : memref<128x128xbf16, #tpu.memory_space<vmem>>, vector<128x128xbf16>
      tpu.vector_store %arg12[%28, %c0_16], %27 {strides = array<i32>} : memref<128x128xbf16, #tpu.memory_space<vmem>>, vector<128x128xbf16>,
    } else {
    }
    %c1_i32 = arith.constant 1 : i32
    %6 = arith.cmpi eq, %arg0, %c1_i32 : i32
    %7 = arith.extui %6 : i1 to i32
    %c0_i32_5 = arith.constant 0 : i32
    %8 = arith.cmpi ne, %7, %c0_i32_5 : i32
    scf.if %8 {
      %c0_6 = arith.constant 0 : index
      %c0_7 = arith.constant 0 : index
      %9 = vector.load %arg2[%c0_6, %c0_7] : memref<128x128xbf16, #tpu.memory_space<vmem>>, vector<128x128xbf16>
      %c0_8 = arith.constant 0 : index
      %c0_9 = arith.constant 0 : index
      %10 = vector.load %arg12[%c0_8, %c0_9] : memref<128x128xbf16, #tpu.memory_space<vmem>>, vector<128x128xbf16>
      %cst = arith.constant dense<0.000000e+00> : vector<128x128xf32>
      %11 = tpu.matmul %9, %10, %cst {dimension_numbers = #tpu.dot_dimension_numbers<[1], [0], [0], [1], [0, 0, 1, 1], [], []>} : vector<128x128xbf16>, vector<128x128xbf16>, vector<128x128xf32> -> vector<128x128xf32>
      %12 = vector.broadcast %0 : vector<128x1xf32> to vector<128x128xf32>
      %13 = arith.mulf %12, %11 : vector<128x128xf32>
      %14 = vector.broadcast %2 : vector<1x128xf32> to vector<128x128xf32>
      %15 = arith.addf %13, %14 : vector<128x128xf32>
      %cst_10 = arith.constant 0.000000e+00 : f32
      %16 = vector.broadcast %cst_10 : f32 to vector<128x128xf32>
      %17 = arith.maximumf %15, %16 : vector<128x128xf32>
      %c0_11 = arith.constant 0 : index
      %c0_12 = arith.constant 0 : index
      %18 = vector.load %arg13[%c0_11, %c0_12] : memref<8x128xf32, #tpu.memory_space<vmem>>, vector<8x128xf32>
      %c0_13 = arith.constant 0 : index
      %c0_14 = arith.constant 0 : index
      %19 = vector.load %arg7[%c0_13, %c0_14] : memref<8x128xbf16, #tpu.memory_space<vmem>>, vector<8x128xbf16>
      %20 = arith.truncf %17 : vector<128x128xf32> to vector<128x128xbf16>
      %cst_15 = arith.constant dense<0.000000e+00> : vector<8x128xf32>
      %21 = tpu.matmul %19, %20, %cst_15 {dimension_numbers = #tpu.dot_dimension_numbers<[1], [0], [0], [1], [0, 0, 1, 1], [], []>} : vector<8x128xbf16>, vector<128x128xbf16>, vector<8x128xf32> -> vector<8x128xf32>
      %22 = arith.addf %18, %21 : vector<8x128xf32>
      %c0_16 = arith.constant 0 : index
      %c0_17 = arith.constant 0 : index
      %23 = vector.load %arg13[%c0_16, %c0_17] : memref<8x128xf32, #tpu.memory_space<vmem>>, vector<8x128xf32>
      tpu.vector_store %arg13[%c0_16, %c0_17], %22 {strides = array<i32>} : memref<8x128xf32, #tpu.memory_space<vmem>>, vector<8x128xf32>,
      %c0_i32_18 = arith.constant 0 : i32
      %24 = arith.cmpi eq, %arg1, %c0_i32_18 : i32
      %25 = arith.extui %24 : i1 to i32
      %c0_i32_19 = arith.constant 0 : i32
      %26 = arith.cmpi ne, %25, %c0_i32_19 : i32
      scf.if %26 {
        %c0_20 = arith.constant 0 : index
        %c0_21 = arith.constant 0 : index
        %27 = vector.load %arg13[%c0_20, %c0_21] : memref<8x128xf32, #tpu.memory_space<vmem>>, vector<8x128xf32>
        %c0_22 = arith.constant 0 : index
        %c0_23 = arith.constant 0 : index
        %28 = vector.load %arg8[%c0_22, %c0_23] : memref<8x1xf32, #tpu.memory_space<vmem>>, vector<8x1xf32>
        %29 = vector.broadcast %28 : vector<8x1xf32> to vector<8x128xf32>
        %30 = arith.mulf %27, %29 : vector<8x128xf32>
        %c0_24 = arith.constant 0 : index
        %c0_25 = arith.constant 0 : index
        %31 = vector.load %arg9[%c0_24, %c0_25] : memref<128x128xf32, #tpu.memory_space<vmem>>, vector<128x128xf32>
        %cst_26 = arith.constant dense<0.000000e+00> : vector<8x128xf32>
        %32 = tpu.matmul %30, %31, %cst_26 {dimension_numbers = #tpu.dot_dimension_numbers<[1], [0], [0], [1], [0, 0, 1, 1], [], []>} : vector<8x128xf32>, vector<128x128xf32>, vector<8x128xf32> -> vector<8x128xf32>
        %c0_27 = arith.constant 0 : index
        %c0_28 = arith.constant 0 : index
        %33 = vector.load %arg10[%c0_27, %c0_28] : memref<1x128xf32, #tpu.memory_space<vmem>>, vector<1x128xf32>
        %34 = vector.broadcast %33 : vector<1x128xf32> to vector<8x128xf32>
        %35 = arith.addf %32, %34 : vector<8x128xf32>
        %c0_29 = arith.constant 0 : index
        %c0_30 = arith.constant 0 : index
        %36 = vector.load %arg11[%c0_29, %c0_30] : memref<8x128xf32, #tpu.memory_space<vmem>>, vector<8x128xf32>
        tpu.vector_store %arg11[%c0_29, %c0_30], %35 {strides = array<i32>} : memref<8x128xf32, #tpu.memory_space<vmem>>, vector<8x128xf32>,
      } else {
      }
    } else {
    }
    return
  }
  func.func @transform_0(%arg0: i32, %arg1: i32) -> (i32, i32) {
    %c0_i32 = arith.constant 0 : i32
    %c0_i32_0 = arith.constant 0 : i32
    return %arg1, %c0_i32 : i32, i32
  }
  func.func @transform_1(%arg0: i32, %arg1: i32) -> (i32, i32) {
    %c0_i32 = arith.constant 0 : i32
    %c0_i32_0 = arith.constant 0 : i32
    %c0_i32_1 = arith.constant 0 : i32
    return %c0_i32, %c0_i32_0 : i32, i32
  }
  func.func @transform_2(%arg0: i32, %arg1: i32) -> (i32, i32) {
    %c0_i32 = arith.constant 0 : i32
    %c0_i32_0 = arith.constant 0 : i32
    return %arg1, %c0_i32 : i32, i32
  }
  func.func @transform_3(%arg0: i32, %arg1: i32) -> (i32, i32, i32) {
    %c0_i32 = arith.constant 0 : i32
    %c0_i32_0 = arith.constant 0 : i32
    %c0_i32_1 = arith.constant 0 : i32
    return %arg0, %c0_i32, %c0_i32_0 : i32, i32, i32
  }
  func.func @transform_4(%arg0: i32, %arg1: i32) -> (i32, i32) {
    %c0_i32 = arith.constant 0 : i32
    %c0_i32_0 = arith.constant 0 : i32
    %c0_i32_1 = arith.constant 0 : i32
    return %c0_i32, %c0_i32_0 : i32, i32
  }
  func.func @transform_5(%arg0: i32, %arg1: i32) -> (i32, i32) {
    %0 = arith.muli %arg0, %arg1 : i32
    %c0_i32 = arith.constant 0 : i32
    %c0_i32_0 = arith.constant 0 : i32
    return %c0_i32, %0 : i32, i32
  }
  func.func @transform_6(%arg0: i32, %arg1: i32) -> (i32, i32) {
    %c0_i32 = arith.constant 0 : i32
    %c0_i32_0 = arith.constant 0 : i32
    %c0_i32_1 = arith.constant 0 : i32
    return %c0_i32, %c0_i32_0 : i32, i32
  }
  func.func @transform_7(%arg0: i32, %arg1: i32) -> (i32, i32) {
    %c0_i32 = arith.constant 0 : i32
    %c0_i32_0 = arith.constant 0 : i32
    %c0_i32_1 = arith.constant 0 : i32
    return %c0_i32, %c0_i32_0 : i32, i32
  }
  func.func @transform_8(%arg0: i32, %arg1: i32) -> (i32, i32) {
    %c0_i32 = arith.constant 0 : i32
    %c0_i32_0 = arith.constant 0 : i32
    %c0_i32_1 = arith.constant 0 : i32
    return %c0_i32, %c0_i32_0 : i32, i32
  }
  func.func @transform_9(%arg0: i32, %arg1: i32) -> (i32, i32) {
    %c0_i32 = arith.constant 0 : i32
    %c0_i32_0 = arith.constant 0 : i32
    %c0_i32_1 = arith.constant 0 : i32
    return %c0_i32, %c0_i32_0 : i32, i32
  }
}

</mosaic_0001>

<llo_original>
// kernel: gcn_forward.1
$region0: #{gcn_forward.1}
  #allocation0 [shape = 'u32[]', space=smem, size = 0x4, offset = 0x4, fixed_abs, tag = 'smem constant byte address 0x4 - core index']
  #allocation1 [shape = 'u32[72,128]{1,0:T(1,128)}', space=vmem, size = 0x9000, scoped, tag = 'internal scratch']
  #allocation2 [shape = 'bf16[128,128]{1,0:T(8,128)(2,1)}', space=vmem, size = 0x8000, scoped, tag = 'scratch operand']
  #allocation3 [shape = 'f32[8,128]{1,0:T(8,128)}', space=vmem, size = 0x1000, scoped, tag = 'scratch operand']
  %s0 = inlined_call_operand.vmem [shape: bf16[128,128], index: 0, kind: input, shape index: {}]
  %s1 = inlined_call_operand.vmem [shape: bf16[128,128], index: 1, kind: input, shape index: {}]
  %s2 = inlined_call_operand.vmem [shape: f32[128,1], index: 2, kind: input, shape index: {}]
  %s3 = inlined_call_operand.vmem [shape: f32[2,1,128], index: 3, kind: input, shape index: {}]
  %s4 = inlined_call_operand.vmem [shape: f32[128,128], index: 4, kind: input, shape index: {}]
  %s5 = inlined_call_operand.vmem [shape: bf16[8,128], index: 5, kind: input, shape index: {}]
  %s6 = inlined_call_operand.vmem [shape: f32[8,1], index: 6, kind: input, shape index: {}]
  %s7 = inlined_call_operand.vmem [shape: f32[128,128], index: 7, kind: input, shape index: {}]
  %s8 = inlined_call_operand.vmem [shape: f32[1,128], index: 8, kind: input, shape index: {}]
  %s9 = inlined_call_operand.vmem [shape: f32[8,128], index: 9, kind: output, shape index: {}]
  %s10 = sld [smem:[#allocation0]]
  $region85: #{gcn_forward.1} parent=0
    _
  %s12 = ssub.s32 1, %s10
  %s13 = scalar_select 0, %s12, %s10
  loop: start=0, step=1, limit=4
  $region2: #{gcn_forward.1} parent=0 // loop_pre_header
    _
  $region3: #{gcn_forward.1} parent=0 // loop_header
    %s15 = sphi 0, %s19
    %p16 = scmp.ge.s32.totalorder %s15, 4
    %s22 = sphi 0, %s34
    %s23 = sphi 0, %s30
    %s24 = sphi 0, %s22
    %s25 = sphi 0, %s23
    %s26 = sphi 0, %s24
    %s27 = sphi 0, %s25
    %s37 = sphi 0, %s39
    %s40 = sphi 0, %s37
    %s41 = sphi 0, %s40
    %s57 = sphi 0, %s41
    %s61 = sphi 0, %s61
    %s63 = sphi 0, %s61
    %s64 = sphi 0, %s63
    %s78 = sphi 0, %s64
    %s84 = sphi 0, %s86
    %s87 = sphi 0, %s84
    %s88 = sphi 0, %s87
    %s104 = sphi 0, %s88
    %s110 = sphi 0, %s112
    %s113 = sphi 0, %s110
    %s114 = sphi 0, %s113
    %s130 = sphi 0, %s114
    %s134 = sphi 0, %s134
    %s136 = sphi 0, %s134
    %s137 = sphi 0, %s136
    %s151 = sphi 0, %s137
    %s159 = sphi 0, %s161
    %s162 = sphi 0, %s159
    %s163 = sphi 0, %s162
    %s179 = sphi 0, %s163
    %s183 = sphi 0, %s183
    %s185 = sphi 0, %s183
    %s186 = sphi 0, %s185
    %s200 = sphi 0, %s186
    %s204 = sphi 0, %s204
    %s206 = sphi 0, %s204
    %s207 = sphi 0, %s206
    %s221 = sphi 0, %s207
    %s225 = sphi 0, %s225
    %s227 = sphi 0, %s225
    %s228 = sphi 0, %s227
    %s242 = sphi 0, %s228
    %s246 = sphi 0, %s246
    %s248 = sphi 0, %s246
    %s249 = sphi 0, %s248
    %s263 = sphi 0, %s249
  $region4: #{gcn_forward.1} parent=0 // loop_header_branch
    %18 = sbr.rel (%p16) target = $region8
  $region5: #{gcn_forward.1} parent=0 // loop_body
    %s20 = ssub.s32 %s15, 1
    %s21 = ssub.s32 %s15, 2
    %s28 = sadd.s32 1, %s23
    %p29 = scmp.ge.s32.totalorder %s28, 1
    %s30 = scalar_select %p29, 0, %s28
    %s31 = sadd.s32 1, %s22
    %s32 = scalar_select %p29, %s31, %s22
    %p33 = scmp.ge.s32.totalorder %s32, 2
    %s34 = scalar_select %p33, 0, %s32
    %s35 = ssub.s32 %s23, %s30
    %p36 = scmp.eq.s32.totalorder %s35, 0
    %s38 = sadd.s32 %s37, 1
    %s39 = scalar_select %p36, %s37, %s38
    %p42 = pneg %p36
    %p43 = scmp.eq.s32.totalorder %s15, 1
    %p44 = por %p42, %p43
    %p45 = scmp.ne.s32.totalorder %s37, %s40
    %p46 = scmp.eq.s32.totalorder %s15, 0
    %p47 = por %p45, %p46
    %p48 = scmp.ne.s32.totalorder %s37, %s40
    %p49 = scmp.eq.s32.totalorder %s20, 1
    %p50 = por %p48, %p49
    %p51 = scmp.ne.s32.totalorder %s40, %s41
    %p52 = scmp.eq.s32.totalorder %s20, 0
    %p53 = por %p51, %p52
    %p54 = scmp.ne.s32.totalorder %s40, %s41
    %p55 = scmp.eq.s32.totalorder %s21, 1
    %p56 = por %p54, %p55
    %p58 = scmp.ne.s32.totalorder %s41, %s57
    %p59 = scmp.eq.s32.totalorder %s21, 0
    %p60 = por %p58, %p59
    %s62 = sadd.s32 %s61, 1
    %p65 = scmp.eq.s32.totalorder %s15, 1
    %p66 = scmp.ne.s32.totalorder %s61, %s63
    %p67 = scmp.eq.s32.totalorder %s15, 0
    %p68 = por %p66, %p67
    %p69 = scmp.ne.s32.totalorder %s61, %s63
    %p70 = scmp.eq.s32.totalorder %s20, 1
    %p71 = por %p69, %p70
    %p72 = scmp.ne.s32.totalorder %s63, %s64
    %p73 = scmp.eq.s32.totalorder %s20, 0
    %p74 = por %p72, %p73
    %p75 = scmp.ne.s32.totalorder %s63, %s64
    %p76 = scmp.eq.s32.totalorder %s21, 1
    %p77 = por %p75, %p76
    %p79 = scmp.ne.s32.totalorder %s64, %s78
    %p80 = scmp.eq.s32.totalorder %s21, 0
    %p81 = por %p79, %p80
    %s82 = ssub.s32 %s23, %s30
    %p83 = scmp.eq.s32.totalorder %s82, 0
    %s85 = sadd.s32 %s84, 1
    %s86 = scalar_select %p83, %s84, %s85
    %p89 = pneg %p83
    %p90 = scmp.eq.s32.totalorder %s15, 1
    %p91 = por %p89, %p90
    %p92 = scmp.ne.s32.totalorder %s84, %s87
    %p93 = scmp.eq.s32.totalorder %s15, 0
    %p94 = por %p92, %p93
    %p95 = scmp.ne.s32.totalorder %s84, %s87
    %p96 = scmp.eq.s32.totalorder %s20, 1
    %p97 = por %p95, %p96
    %p98 = scmp.ne.s32.totalorder %s87, %s88
    %p99 = scmp.eq.s32.totalorder %s20, 0
    %p100 = por %p98, %p99
    %p101 = scmp.ne.s32.totalorder %s87, %s88
    %p102 = scmp.eq.s32.totalorder %s21, 1
    %p103 = por %p101, %p102
    %p105 = scmp.ne.s32.totalorder %s88, %s104
    %p106 = scmp.eq.s32.totalorder %s21, 0
    %p107 = por %p105, %p106
    %s108 = ssub.s32 %s22, %s34
    %p109 = scmp.eq.s32.totalorder %s108, 0
    %s111 = sadd.s32 %s110, 1
    %s112 = scalar_select %p109, %s110, %s111
    %p115 = pneg %p109
    %p116 = scmp.eq.s32.totalorder %s15, 1
    %p117 = por %p115, %p116
    %p118 = scmp.ne.s32.totalorder %s110, %s113
    %p119 = scmp.eq.s32.totalorder %s15, 0
    %p120 = por %p118, %p119
    %p121 = scmp.ne.s32.totalorder %s110, %s113
    %p122 = scmp.eq.s32.totalorder %s20, 1
    %p123 = por %p121, %p122
    %p124 = scmp.ne.s32.totalorder %s113, %s114
    %p125 = scmp.eq.s32.totalorder %s20, 0
    %p126 = por %p124, %p125
    %p127 = scmp.ne.s32.totalorder %s113, %s114
    %p128 = scmp.eq.s32.totalorder %s21, 1
    %p129 = por %p127, %p128
    %p131 = scmp.ne.s32.totalorder %s114, %s130
    %p132 = scmp.eq.s32.totalorder %s21, 0
    %p133 = por %p131, %p132
    %s135 = sadd.s32 %s134, 1
    %p138 = scmp.eq.s32.totalorder %s15, 1
    %p139 = scmp.ne.s32.totalorder %s134, %s136
    %p140 = scmp.eq.s32.totalorder %s15, 0
    %p141 = por %p139, %p140
    %p142 = scmp.ne.s32.totalorder %s134, %s136
    %p143 = scmp.eq.s32.totalorder %s20, 1
    %p144 = por %p142, %p143
    %p145 = scmp.ne.s32.totalorder %s136, %s137
    %p146 = scmp.eq.s32.totalorder %s20, 0
    %p147 = por %p145, %p146
    %p148 = scmp.ne.s32.totalorder %s136, %s137
    %p149 = scmp.eq.s32.totalorder %s21, 1
    %p150 = por %p148, %p149
    %p152 = scmp.ne.s32.totalorder %s137, %s151
    %p153 = scmp.eq.s32.totalorder %s21, 0
    %p154 = por %p152, %p153
    %s155 = smul.u32 %s22, %s23
    %s156 = smul.u32 %s34, %s30
    %s157 = ssub.s32 %s155, %s156
    %p158 = scmp.eq.s32.totalorder %s157, 0
    %s160 = sadd.s32 %s159, 1
    %s161 = scalar_select %p158, %s159, %s160
    %p164 = pneg %p158
    %p165 = scmp.eq.s32.totalorder %s15, 1
    %p166 = por %p164, %p165
    %p167 = scmp.ne.s32.totalorder %s159, %s162
    %p168 = scmp.eq.s32.totalorder %s15, 0
    %p169 = por %p167, %p168
    %p170 = scmp.ne.s32.totalorder %s159, %s162
    %p171 = scmp.eq.s32.totalorder %s20, 1
    %p172 = por %p170, %p171
    %p173 = scmp.ne.s32.totalorder %s162, %s163
    %p174 = scmp.eq.s32.totalorder %s20, 0
    %p175 = por %p173, %p174
    %p176 = scmp.ne.s32.totalorder %s162, %s163
    %p177 = scmp.eq.s32.totalorder %s21, 1
    %p178 = por %p176, %p177
    %p180 = scmp.ne.s32.totalorder %s163, %s179
    %p181 = scmp.eq.s32.totalorder %s21, 0
    %p182 = por %p180, %p181
    %s184 = sadd.s32 %s183, 1
    %p187 = scmp.eq.s32.totalorder %s15, 1
    %p188 = scmp.ne.s32.totalorder %s183, %s185
    %p189 = scmp.eq.s32.totalorder %s15, 0
    %p190 = por %p188, %p189
    %p191 = scmp.ne.s32.totalorder %s183, %s185
    %p192 = scmp.eq.s32.totalorder %s20, 1
    %p193 = por %p191, %p192
    %p194 = scmp.ne.s32.totalorder %s185, %s186
    %p195 = scmp.eq.s32.totalorder %s20, 0
    %p196 = por %p194, %p195
    %p197 = scmp.ne.s32.totalorder %s185, %s186
    %p198 = scmp.eq.s32.totalorder %s21, 1
    %p199 = por %p197, %p198
    %p201 = scmp.ne.s32.totalorder %s186, %s200
    %p202 = scmp.eq.s32.totalorder %s21, 0
    %p203 = por %p201, %p202
    %s205 = sadd.s32 %s204, 1
    %p208 = scmp.eq.s32.totalorder %s15, 1
    %p209 = scmp.ne.s32.totalorder %s204, %s206
    %p210 = scmp.eq.s32.totalorder %s15, 0
    %p211 = por %p209, %p210
    %p212 = scmp.ne.s32.totalorder %s204, %s206
    %p213 = scmp.eq.s32.totalorder %s20, 1
    %p214 = por %p212, %p213
    %p215 = scmp.ne.s32.totalorder %s206, %s207
    %p216 = scmp.eq.s32.totalorder %s20, 0
    %p217 = por %p215, %p216
    %p218 = scmp.ne.s32.totalorder %s206, %s207
    %p219 = scmp.eq.s32.totalorder %s21, 1
    %p220 = por %p218, %p219
    %p222 = scmp.ne.s32.totalorder %s207, %s221
    %p223 = scmp.eq.s32.totalorder %s21, 0
    %p224 = por %p222, %p223
    %s226 = sadd.s32 %s225, 1
    %p229 = scmp.eq.s32.totalorder %s15, 1
    %p230 = scmp.ne.s32.totalorder %s225, %s227
    %p231 = scmp.eq.s32.totalorder %s15, 0
    %p232 = por %p230, %p231
    %p233 = scmp.ne.s32.totalorder %s225, %s227
    %p234 = scmp.eq.s32.totalorder %s20, 1
    %p235 = por %p233, %p234
    %p236 = scmp.ne.s32.totalorder %s227, %s228
    %p237 = scmp.eq.s32.totalorder %s20, 0
    %p238 = por %p236, %p237
    %p239 = scmp.ne.s32.totalorder %s227, %s228
    %p240 = scmp.eq.s32.totalorder %s21, 1
    %p241 = por %p239, %p240
    %p243 = scmp.ne.s32.totalorder %s228, %s242
    %p244 = scmp.eq.s32.totalorder %s21, 0
    %p245 = por %p243, %p244
    %s247 = sadd.s32 %s246, 1
    %p250 = scmp.eq.s32.totalorder %s15, 1
    %p251 = scmp.ne.s32.totalorder %s246, %s248
    %p252 = scmp.eq.s32.totalorder %s15, 0
    %p253 = por %p251, %p252
    %p254 = scmp.ne.s32.totalorder %s246, %s248
    %p255 = scmp.eq.s32.totalorder %s20, 1
    %p256 = por %p254, %p255
    %p257 = scmp.ne.s32.totalorder %s248, %s249
    %p258 = scmp.eq.s32.totalorder %s20, 0
    %p259 = por %p257, %p258
    %p260 = scmp.ne.s32.totalorder %s248, %s249
    %p261 = scmp.eq.s32.totalorder %s21, 1
    %p262 = por %p260, %p261
    %p264 = scmp.ne.s32.totalorder %s249, %s263
    %p265 = scmp.eq.s32.totalorder %s21, 0
    %p266 = por %p264, %p265
    %p267 = scmp.le.s32.totalorder 1, %s15
    %p268 = scmp.lt.s32.totalorder %s15, 3
    %p269 = pnand %p267, %p268
    %p270 = pneg %p269
    // Predicated region
    $region9: #{gcn_forward.1} parent=5 // pred_check
      _
    $region10: #{gcn_forward.1} parent=5 // pred_check_branch
      %272 = sbr.rel (%p269) target = $region12
    $region11: #{gcn_forward.1} parent=5 // pred_region
      %s273 = ssub.s32 %s15, 1
      // Predicated region
      $region13: #{gcn_forward.1} parent=11 // pred_check
        %p274 = pneg %p53
      $region14: #{gcn_forward.1} parent=11 // pred_check_branch
        %276 = sbr.rel (%p274) target = $region16
      $region15: #{gcn_forward.1} parent=11 // pred_region
        %s277 = smul.u32 16, %s25
        %p278 = scmp.lt.s32.totalorder %s277, 15
        %s279 = scalar_select %p278, %s277, 15
        %s280 = smul.addr %s279, 4
        %s281 = scalar_lea.vmem %s0, %s280
        %s282 = smul.u32 16, %s25
      $region16: #{gcn_forward.1} parent=11 // pred_fallthru
        _
      // Predicated region
      $region17: #{gcn_forward.1} parent=11 // pred_check
        %p283 = pneg %p74
      $region18: #{gcn_forward.1} parent=11 // pred_check_branch
        %285 = sbr.rel (%p283) target = $region20
      $region19: #{gcn_forward.1} parent=11 // pred_region
        _
      $region20: #{gcn_forward.1} parent=11 // pred_fallthru
        _
      // Predicated region
      $region21: #{gcn_forward.1} parent=11 // pred_check
        %p286 = pneg %p100
      $region22: #{gcn_forward.1} parent=11 // pred_check_branch
        %288 = sbr.rel (%p286) target = $region24
      $region23: #{gcn_forward.1} parent=11 // pred_region
        %s289 = smul.u32 16, %s25
        %p290 = scmp.lt.s32.totalorder %s289, 15
        %s291 = scalar_select %p290, %s289, 15
        %s292 = smul.addr %s291, 8
        %s293 = scalar_lea.vmem %s2, %s292
        %s294 = smul.u32 16, %s25
      $region24: #{gcn_forward.1} parent=11 // pred_fallthru
        _
      // Predicated region
      $region25: #{gcn_forward.1} parent=11 // pred_check
        %p295 = pneg %p147
      $region26: #{gcn_forward.1} parent=11 // pred_check_branch
        %297 = sbr.rel (%p295) target = $region28
      $region27: #{gcn_forward.1} parent=11 // pred_region
        _
      $region28: #{gcn_forward.1} parent=11 // pred_fallthru
        _
      // Predicated region
      $region29: #{gcn_forward.1} parent=11 // pred_check
        %p298 = pneg %p196
      $region30: #{gcn_forward.1} parent=11 // pred_check_branch
        %300 = sbr.rel (%p298) target = $region32
      $region31: #{gcn_forward.1} parent=11 // pred_region
        _
      $region32: #{gcn_forward.1} parent=11 // pred_fallthru
        _
      // Predicated region
      $region33: #{gcn_forward.1} parent=11 // pred_check
        %p301 = pneg %p217
      $region34: #{gcn_forward.1} parent=11 // pred_check_branch
        %303 = sbr.rel (%p301) target = $region36
      $region35: #{gcn_forward.1} parent=11 // pred_region
        _
      $region36: #{gcn_forward.1} parent=11 // pred_fallthru
        _
      // Predicated region
      $region37: #{gcn_forward.1} parent=11 // pred_check
        %p304 = pneg %p238
      $region38: #{gcn_forward.1} parent=11 // pred_check_branch
        %306 = sbr.rel (%p304) target = $region40
      $region39: #{gcn_forward.1} parent=11 // pred_region
        _
      $region40: #{gcn_forward.1} parent=11 // pred_fallthru
        _
    $region12: #{gcn_forward.1} parent=5 // pred_fallthru
      _
    %p307 = scmp.lt.s32.totalorder %s15, 2
    // Predicated region
    $region41: #{gcn_forward.1} parent=5 // pred_check
      %p308 = pneg %p307
    $region42: #{gcn_forward.1} parent=5 // pred_check_branch
      %310 = sbr.rel (%p308) target = $region44
    $region43: #{gcn_forward.1} parent=5 // pred_region
      // Predicated region
      $region45: #{gcn_forward.1} parent=43 // pred_check
        %p311 = pneg %p120
      $region46: #{gcn_forward.1} parent=43 // pred_check_branch
        %313 = sbr.rel (%p311) target = $region48
      $region47: #{gcn_forward.1} parent=43 // pred_region
        %p314 = scmp.lt.s32.totalorder %s22, 1
        %s315 = scalar_select %p314, %s22, 1
        %s316 = scalar_lea.vmem %s3, %s315
      $region48: #{gcn_forward.1} parent=43 // pred_fallthru
        _
      // Predicated region
      $region49: #{gcn_forward.1} parent=43 // pred_check
        %p317 = pneg %p169
      $region50: #{gcn_forward.1} parent=43 // pred_check_branch
        %319 = sbr.rel (%p317) target = $region52
      $region51: #{gcn_forward.1} parent=43 // pred_region
        %s320 = smul.u32 %s22, %s23
        %p321 = scmp.lt.s32.totalorder %s320, 0
        %s322 = scalar_select %p321, %s320, 0
        %s323 = smul.addr %s322, 4
        %s324 = scalar_lea.vmem %s5, %s323
        %s325 = smul.u32 %s22, %s23
      $region52: #{gcn_forward.1} parent=43 // pred_fallthru
        _
    $region44: #{gcn_forward.1} parent=5 // pred_fallthru
      _
    %p326 = scmp.le.s32.totalorder 1, %s15
    %p327 = scmp.lt.s32.totalorder %s15, 3
    %p328 = pnand %p326, %p327
    %p329 = pneg %p328
    // Predicated region
    $region53: #{gcn_forward.1} parent=5 // pred_check
      _
    $region54: #{gcn_forward.1} parent=5 // pred_check_branch
      %331 = sbr.rel (%p328) target = $region56
    $region55: #{gcn_forward.1} parent=5 // pred_region
      %s332 = ssub.s32 %s15, 1
      %s333 = smul.u32 16, %s25
      %p334 = scmp.lt.s32.totalorder %s333, 15
      %s335 = scalar_select %p334, %s333, 15
      %s336 = smul.addr %s335, 4
      %s337 = scalar_lea.vmem %s0, %s336
      %p338 = pneg %p53
      %p339 = pneg %p50
      %p340 = pneg %p74
      %p341 = pneg %p71
      %s342 = smul.u32 16, %s25
      %p343 = scmp.lt.s32.totalorder %s342, 15
      %s344 = scalar_select %p343, %s342, 15
      %s345 = smul.addr %s344, 8
      %s346 = scalar_lea.vmem %s2, %s345
      %p347 = pneg %p100
      %p348 = pneg %p97
      %p349 = scmp.lt.s32.totalorder %s24, 1
      %s350 = scalar_select %p349, %s24, 1
      %s351 = scalar_lea.vmem %s3, %s350
      %p352 = pneg %p126
      %p353 = pneg %p123
      %p354 = pneg %p147
      %p355 = pneg %p144
      %s356 = smul.u32 %s24, %s25
      %p357 = scmp.lt.s32.totalorder %s356, 0
      %s358 = scalar_select %p357, %s356, 0
      %s359 = smul.addr %s358, 4
      %s360 = scalar_lea.vmem %s5, %s359
      %p361 = pneg %p175
      %p362 = pneg %p172
      %p363 = pneg %p196
      %p364 = pneg %p193
      %p365 = pneg %p217
      %p366 = pneg %p214
      %p367 = pneg %p238
      %p368 = pneg %p235
      %p369 = pneg %p259
      %p370 = pneg %p256
      %s371 = smul.u32 16, %s25
      %p372 = scmp.lt.s32.totalorder %s371, 15
      %s373 = scalar_select %p372, %s371, 15
      %s374 = smul.addr %s373, 4
      %s375 = scalar_lea.vmem %s0, %s374
      %s376 = smul.u32 16, %s25
      %s377 = smul.u32 16, %s25
      %p378 = scmp.lt.s32.totalorder %s377, 15
      %s379 = scalar_select %p378, %s377, 15
      %s380 = smul.addr %s379, 8
      %s381 = scalar_lea.vmem %s2, %s380
      %s382 = smul.u32 16, %s25
      %p383 = scmp.lt.s32.totalorder %s24, 1
      %s384 = scalar_select %p383, %s24, 1
      %s385 = scalar_lea.vmem %s3, %s384
      %s386 = smul.u32 %s24, %s25
      %p387 = scmp.lt.s32.totalorder %s386, 0
      %s388 = scalar_select %p387, %s386, 0
      %s389 = smul.addr %s388, 4
      %s390 = scalar_lea.vmem %s5, %s389
      %s391 = smul.u32 %s24, %s25
      %v392 = vld [vmem:[%s381] sm:$0xff]
      %v393 = vld [vmem:[%s381 + $0x8] sm:$0xff]
      %v394 = vld [vmem:[%s381 + $0x10] sm:$0xff]
      %v395 = vld [vmem:[%s381 + $0x18] sm:$0xff]
      %v396 = vld [vmem:[%s381 + $0x20] sm:$0xff]
      %v397 = vld [vmem:[%s381 + $0x28] sm:$0xff]
      %v398 = vld [vmem:[%s381 + $0x30] sm:$0xff]
      %v399 = vld [vmem:[%s381 + $0x38] sm:$0xff]
      %v400 = vld [vmem:[%s381 + $0x40] sm:$0xff]
      %v401 = vld [vmem:[%s381 + $0x48] sm:$0xff]
      %v402 = vld [vmem:[%s381 + $0x50] sm:$0xff]
      %v403 = vld [vmem:[%s381 + $0x58] sm:$0xff]
      %v404 = vld [vmem:[%s381 + $0x60] sm:$0xff]
      %v405 = vld [vmem:[%s381 + $0x68] sm:$0xff]
      %v406 = vld [vmem:[%s381 + $0x70] sm:$0xff]
      %v407 = vld [vmem:[%s381 + $0x78] sm:$0xff]
      %v408 = vld [vmem:[%s385] sm:$0x1]
      %p409 = scmp.eq.s32.totalorder %s24, 0
      // Predicated region
      $region57: #{gcn_forward.1} parent=55 // pred_check
        %p410 = pneg %p409
      $region58: #{gcn_forward.1} parent=55 // pred_check_branch
        %412 = sbr.rel (%p410) target = $region60
      $region59: #{gcn_forward.1} parent=55 // pred_region
        %p413 = scmp.eq.s32.totalorder %s25, 0
        // Predicated region
        $region61: #{gcn_forward.1} parent=59 // pred_check
          %p414 = pneg %p413
        $region62: #{gcn_forward.1} parent=59 // pred_check_branch
          %416 = sbr.rel (%p414) target = $region64
        $region63: #{gcn_forward.1} parent=59 // pred_region
          %417 = vst [vmem:[#allocation3] sm:$0xff] 0.0
        $region64: #{gcn_forward.1} parent=59 // pred_fallthru
          _
        %v418 = vld [vmem:[%s375] sm:$0xf]
        %v419 = vld [vmem:[%s375 + $0x4] sm:$0xf]
        %v420 = vld [vmem:[%s375 + $0x8] sm:$0xf]
        %v421 = vld [vmem:[%s375 + $0xc] sm:$0xf]
        %v422 = vld [vmem:[%s375 + $0x10] sm:$0xf]
        %v423 = vld [vmem:[%s375 + $0x14] sm:$0xf]
        %v424 = vld [vmem:[%s375 + $0x18] sm:$0xf]
        %v425 = vld [vmem:[%s375 + $0x1c] sm:$0xf]
        %v426 = vld [vmem:[%s375 + $0x20] sm:$0xf]
        %v427 = vld [vmem:[%s375 + $0x24] sm:$0xf]
        %v428 = vld [vmem:[%s375 + $0x28] sm:$0xf]
        %v429 = vld [vmem:[%s375 + $0x2c] sm:$0xf]
        %v430 = vld [vmem:[%s375 + $0x30] sm:$0xf]
        %v431 = vld [vmem:[%s375 + $0x34] sm:$0xf]
        %v432 = vld [vmem:[%s375 + $0x38] sm:$0xf]
        %v433 = vld [vmem:[%s375 + $0x3c] sm:$0xf]
        %v434 = vld [vmem:[%s1] sm:$0xf]
        %v435 = vld [vmem:[%s1 + $0x4] sm:$0xf]
        %v436 = vld [vmem:[%s1 + $0x8] sm:$0xf]
        %v437 = vld [vmem:[%s1 + $0xc] sm:$0xf]
        %v438 = vld [vmem:[%s1 + $0x10] sm:$0xf]
        %v439 = vld [vmem:[%s1 + $0x14] sm:$0xf]
        %v440 = vld [vmem:[%s1 + $0x18] sm:$0xf]
        %v441 = vld [vmem:[%s1 + $0x1c] sm:$0xf]
        %v442 = vld [vmem:[%s1 + $0x20] sm:$0xf]
        %v443 = vld [vmem:[%s1 + $0x24] sm:$0xf]
        %v444 = vld [vmem:[%s1 + $0x28] sm:$0xf]
        %v445 = vld [vmem:[%s1 + $0x2c] sm:$0xf]
        %v446 = vld [vmem:[%s1 + $0x30] sm:$0xf]
        %v447 = vld [vmem:[%s1 + $0x34] sm:$0xf]
        %v448 = vld [vmem:[%s1 + $0x38] sm:$0xf]
        %v449 = vld [vmem:[%s1 + $0x3c] sm:$0xf]
        %v466 = vunpack.c.l.b16 %v418
        %v467 = vunpack.c.l.b16 %v419
        %v468 = vunpack.c.l.b16 %v420
        %v469 = vunpack.c.l.b16 %v421
        %v470 = vunpack.c.l.b16 %v422
        %v471 = vunpack.c.l.b16 %v423
        %v472 = vunpack.c.l.b16 %v424
        %v473 = vunpack.c.l.b16 %v425
        %v474 = vunpack.c.l.b16 %v426
        %v475 = vunpack.c.l.b16 %v427
        %v476 = vunpack.c.l.b16 %v428
        %v477 = vunpack.c.l.b16 %v429
        %v478 = vunpack.c.l.b16 %v430
        %v479 = vunpack.c.l.b16 %v431
        %v480 = vunpack.c.l.b16 %v432
        %v481 = vunpack.c.l.b16 %v433
        %v482 = vpack.c.b16 %v467, %v466
        %v483 = vpack.c.b16 %v469, %v468
        %v484 = vpack.c.b16 %v471, %v470
        %v485 = vpack.c.b16 %v473, %v472
        %v486 = vpack.c.b16 %v475, %v474
        %v487 = vpack.c.b16 %v477, %v476
        %v488 = vpack.c.b16 %v479, %v478
        %v489 = vpack.c.b16 %v481, %v480
        %v514 = vunpack.c.l.b16 %v434
        %v515 = vunpack.c.l.b16 %v435
        %v516 = vunpack.c.l.b16 %v436
        %v517 = vunpack.c.l.b16 %v437
        %v518 = vunpack.c.l.b16 %v438
        %v519 = vunpack.c.l.b16 %v439
        %v520 = vunpack.c.l.b16 %v440
        %v521 = vunpack.c.l.b16 %v441
        %v522 = vunpack.c.l.b16 %v442
        %v523 = vunpack.c.l.b16 %v443
        %v524 = vunpack.c.l.b16 %v444
        %v525 = vunpack.c.l.b16 %v445
        %v526 = vunpack.c.l.b16 %v446
        %v527 = vunpack.c.l.b16 %v447
        %v528 = vunpack.c.l.b16 %v448
        %v529 = vunpack.c.l.b16 %v449
        %v530 = vpack.c.b16 %v515, %v514
        %v531 = vpack.c.b16 %v517, %v516
        %v532 = vpack.c.b16 %v519, %v518
        %v533 = vpack.c.b16 %v521, %v520
        %v534 = vpack.c.b16 %v523, %v522
        %v535 = vpack.c.b16 %v525, %v524
        %v536 = vpack.c.b16 %v527, %v526
        %v537 = vpack.c.b16 %v529, %v528
        %546 = vmatpush.bf16.msra.mxu0 %v537
        %547 = vmatpush.bf16.msra.mxu0 %v536
        %548 = vmatpush.bf16.msra.mxu0 %v535
        %549 = vmatpush.bf16.msra.mxu0 %v534
        %550 = vmatpush.bf16.msra.mxu0 %v533
        %551 = vmatpush.bf16.msra.mxu0 %v532
        %552 = vmatpush.bf16.msra.mxu0 %v531
        %553 = vmatpush.bf16.msra.mxu0 %v530
        %554 = vmatmul.bf16.gmra.mxu0 %v482
        %v555 = vpop.f32.mrf.mxu0
        %v556 = vadd.f32 0.0, %v555
        %v557 = vpop.f32.mrf.mxu0
        %v558 = vadd.f32 0.0, %v557
        %559 = vmatmul.bf16.gmra.mxu0 %v483
        %v560 = vpop.f32.mrf.mxu0
        %v561 = vadd.f32 0.0, %v560
        %v562 = vpop.f32.mrf.mxu0
        %v563 = vadd.f32 0.0, %v562
        %564 = vmatmul.bf16.gmra.mxu0 %v484
        %v565 = vpop.f32.mrf.mxu0
        %v566 = vadd.f32 0.0, %v565
        %v567 = vpop.f32.mrf.mxu0
        %v568 = vadd.f32 0.0, %v567
        %569 = vmatmul.bf16.gmra.mxu0 %v485
        %v570 = vpop.f32.mrf.mxu0
        %v571 = vadd.f32 0.0, %v570
        %v572 = vpop.f32.mrf.mxu0
        %v573 = vadd.f32 0.0, %v572
        %574 = vmatmul.bf16.gmra.mxu0 %v486
        %v575 = vpop.f32.mrf.mxu0
        %v576 = vadd.f32 0.0, %v575
        %v577 = vpop.f32.mrf.mxu0
        %v578 = vadd.f32 0.0, %v577
        %579 = vmatmul.bf16.gmra.mxu0 %v487
        %v580 = vpop.f32.mrf.mxu0
        %v581 = vadd.f32 0.0, %v580
        %v582 = vpop.f32.mrf.mxu0
        %v583 = vadd.f32 0.0, %v582
        %584 = vmatmul.bf16.gmra.mxu0 %v488
        %v585 = vpop.f32.mrf.mxu0
        %v586 = vadd.f32 0.0, %v585
        %v587 = vpop.f32.mrf.mxu0
        %v588 = vadd.f32 0.0, %v587
        %589 = vmatmul.bf16.gmra.mxu0 %v489
        %v590 = vpop.f32.mrf.mxu0
        %v591 = vadd.f32 0.0, %v590
        %v592 = vpop.f32.mrf.mxu0
        %v593 = vadd.f32 0.0, %v592
        %594 = vdwg.mxu0
        %596 = vset.pattern.permute.xlu0 0
        %597 = vperm.xlu0 %596, %v392
        %v598 = vpop.permute.xlu0 %597
        %601 = vset.pattern.permute.xlu0 0
        %602 = vperm.xlu0 %601, %v393
        %v603 = vpop.permute.xlu0 %602
        %606 = vset.pattern.permute.xlu0 0
        %607 = vperm.xlu0 %606, %v394
        %v608 = vpop.permute.xlu0 %607
        %611 = vset.pattern.permute.xlu0 0
        %612 = vperm.xlu0 %611, %v395
        %v613 = vpop.permute.xlu0 %612
        %616 = vset.pattern.permute.xlu0 0
        %617 = vperm.xlu0 %616, %v396
        %v618 = vpop.permute.xlu0 %617
        %621 = vset.pattern.permute.xlu0 0
        %622 = vperm.xlu0 %621, %v397
        %v623 = vpop.permute.xlu0 %622
        %626 = vset.pattern.permute.xlu0 0
        %627 = vperm.xlu0 %626, %v398
        %v628 = vpop.permute.xlu0 %627
        %631 = vset.pattern.permute.xlu0 0
        %632 = vperm.xlu0 %631, %v399
        %v633 = vpop.permute.xlu0 %632
        %636 = vset.pattern.permute.xlu0 0
        %637 = vperm.xlu0 %636, %v400
        %v638 = vpop.permute.xlu0 %637
        %641 = vset.pattern.permute.xlu0 0
        %642 = vperm.xlu0 %641, %v401
        %v643 = vpop.permute.xlu0 %642
        %646 = vset.pattern.permute.xlu0 0
        %647 = vperm.xlu0 %646, %v402
        %v648 = vpop.permute.xlu0 %647
        %651 = vset.pattern.permute.xlu0 0
        %652 = vperm.xlu0 %651, %v403
        %v653 = vpop.permute.xlu0 %652
        %656 = vset.pattern.permute.xlu0 0
        %657 = vperm.xlu0 %656, %v404
        %v658 = vpop.permute.xlu0 %657
        %661 = vset.pattern.permute.xlu0 0
        %662 = vperm.xlu0 %661, %v405
        %v663 = vpop.permute.xlu0 %662
        %666 = vset.pattern.permute.xlu0 0
        %667 = vperm.xlu0 %666, %v406
        %v668 = vpop.permute.xlu0 %667
        %671 = vset.pattern.permute.xlu0 0
        %672 = vperm.xlu0 %671, %v407
        %v673 = vpop.permute.xlu0 %672
        %v675 = vmul.f32 %v598, %v556
        %v676 = vmul.f32 %v603, %v558
        %v677 = vmul.f32 %v608, %v561
        %v678 = vmul.f32 %v613, %v563
        %v679 = vmul.f32 %v618, %v566
        %v680 = vmul.f32 %v623, %v568
        %v681 = vmul.f32 %v628, %v571
        %v682 = vmul.f32 %v633, %v573
        %v683 = vmul.f32 %v638, %v576
        %v684 = vmul.f32 %v643, %v578
        %v685 = vmul.f32 %v648, %v581
        %v686 = vmul.f32 %v653, %v583
        %v687 = vmul.f32 %v658, %v586
        %v688 = vmul.f32 %v663, %v588
        %v689 = vmul.f32 %v668, %v591
        %v690 = vmul.f32 %v673, %v593
        %v692 = vperm.slane %v408, 0
        %v694 = vadd.f32 %v675, %v692
        %v695 = vadd.f32 %v676, %v692
        %v696 = vadd.f32 %v677, %v692
        %v697 = vadd.f32 %v678, %v692
        %v698 = vadd.f32 %v679, %v692
        %v699 = vadd.f32 %v680, %v692
        %v700 = vadd.f32 %v681, %v692
        %v701 = vadd.f32 %v682, %v692
        %v702 = vadd.f32 %v683, %v692
        %v703 = vadd.f32 %v684, %v692
        %v704 = vadd.f32 %v685, %v692
        %v705 = vadd.f32 %v686, %v692
        %v706 = vadd.f32 %v687, %v692
        %v707 = vadd.f32 %v688, %v692
        %v708 = vadd.f32 %v689, %v692
        %v709 = vadd.f32 %v690, %v692
        %v710 = vmax.f32 %v694, 0.0
        %v711 = vmax.f32 %v695, 0.0
        %v712 = vmax.f32 %v696, 0.0
        %v713 = vmax.f32 %v697, 0.0
        %v714 = vmax.f32 %v698, 0.0
        %v715 = vmax.f32 %v699, 0.0
        %v716 = vmax.f32 %v700, 0.0
        %v717 = vmax.f32 %v701, 0.0
        %v718 = vmax.f32 %v702, 0.0
        %v719 = vmax.f32 %v703, 0.0
        %v720 = vmax.f32 %v704, 0.0
        %v721 = vmax.f32 %v705, 0.0
        %v722 = vmax.f32 %v706, 0.0
        %v723 = vmax.f32 %v707, 0.0
        %v724 = vmax.f32 %v708, 0.0
        %v725 = vmax.f32 %v709, 0.0
        %v726 = vld [vmem:[%s4] sm:$0xff]
        %v727 = vld [vmem:[%s4 + $0x8] sm:$0xff]
        %v728 = vld [vmem:[%s4 + $0x10] sm:$0xff]
        %v729 = vld [vmem:[%s4 + $0x18] sm:$0xff]
        %v730 = vld [vmem:[%s4 + $0x20] sm:$0xff]
        %v731 = vld [vmem:[%s4 + $0x28] sm:$0xff]
        %v732 = vld [vmem:[%s4 + $0x30] sm:$0xff]
        %v733 = vld [vmem:[%s4 + $0x38] sm:$0xff]
        %v734 = vld [vmem:[%s4 + $0x40] sm:$0xff]
        %v735 = vld [vmem:[%s4 + $0x48] sm:$0xff]
        %v736 = vld [vmem:[%s4 + $0x50] sm:$0xff]
        %v737 = vld [vmem:[%s4 + $0x58] sm:$0xff]
        %v738 = vld [vmem:[%s4 + $0x60] sm:$0xff]
        %v739 = vld [vmem:[%s4 + $0x68] sm:$0xff]
        %v740 = vld [vmem:[%s4 + $0x70] sm:$0xff]
        %v741 = vld [vmem:[%s4 + $0x78] sm:$0xff]
        %742 = vmatpush.msra.mxu0 %v741
        %743 = vmatpush.msra.mxu0 %v740
        %744 = vmatpush.msra.mxu0 %v739
        %745 = vmatpush.msra.mxu0 %v738
        %746 = vmatpush.msra.mxu0 %v737
        %747 = vmatpush.msra.mxu0 %v736
        %748 = vmatpush.msra.mxu0 %v735
        %749 = vmatpush.msra.mxu0 %v734
        %750 = vmatpush.msra.mxu0 %v733
        %751 = vmatpush.msra.mxu0 %v732
        %752 = vmatpush.msra.mxu0 %v731
        %753 = vmatpush.msra.mxu0 %v730
        %754 = vmatpush.msra.mxu0 %v729
        %755 = vmatpush.msra.mxu0 %v728
        %756 = vmatpush.msra.mxu0 %v727
        %757 = vmatpush.msra.mxu0 %v726
        %758 = vmatmul.f32.gmra.mxu0 %v710
        %v759 = vpop.f32.mrf.mxu0
        %v760 = vadd.f32 0.0, %v759
        %761 = vmatmul.f32.gmra.mxu0 %v711
        %v762 = vpop.f32.mrf.mxu0
        %v763 = vadd.f32 0.0, %v762
        %764 = vmatmul.f32.gmra.mxu0 %v712
        %v765 = vpop.f32.mrf.mxu0
        %v766 = vadd.f32 0.0, %v765
        %767 = vmatmul.f32.gmra.mxu0 %v713
        %v768 = vpop.f32.mrf.mxu0
        %v769 = vadd.f32 0.0, %v768
        %770 = vmatmul.f32.gmra.mxu0 %v714
        %v771 = vpop.f32.mrf.mxu0
        %v772 = vadd.f32 0.0, %v771
        %773 = vmatmul.f32.gmra.mxu0 %v715
        %v774 = vpop.f32.mrf.mxu0
        %v775 = vadd.f32 0.0, %v774
        %776 = vmatmul.f32.gmra.mxu0 %v716
        %v777 = vpop.f32.mrf.mxu0
        %v778 = vadd.f32 0.0, %v777
        %779 = vmatmul.f32.gmra.mxu0 %v717
        %v780 = vpop.f32.mrf.mxu0
        %v781 = vadd.f32 0.0, %v780
        %782 = vmatmul.f32.gmra.mxu0 %v718
        %v783 = vpop.f32.mrf.mxu0
        %v784 = vadd.f32 0.0, %v783
        %785 = vmatmul.f32.gmra.mxu0 %v719
        %v786 = vpop.f32.mrf.mxu0
        %v787 = vadd.f32 0.0, %v786
        %788 = vmatmul.f32.gmra.mxu0 %v720
        %v789 = vpop.f32.mrf.mxu0
        %v790 = vadd.f32 0.0, %v789
        %791 = vmatmul.f32.gmra.mxu0 %v721
        %v792 = vpop.f32.mrf.mxu0
        %v793 = vadd.f32 0.0, %v792
        %794 = vmatmul.f32.gmra.mxu0 %v722
        %v795 = vpop.f32.mrf.mxu0
        %v796 = vadd.f32 0.0, %v795
        %797 = vmatmul.f32.gmra.mxu0 %v723
        %v798 = vpop.f32.mrf.mxu0
        %v799 = vadd.f32 0.0, %v798
        %800 = vmatmul.f32.gmra.mxu0 %v724
        %v801 = vpop.f32.mrf.mxu0
        %v802 = vadd.f32 0.0, %v801
        %803 = vmatmul.f32.gmra.mxu0 %v725
        %v804 = vpop.f32.mrf.mxu0
        %v805 = vadd.f32 0.0, %v804
        %806 = vdwg.mxu0
        %s807 = smul.u32 %s25, 128
        %v808 = vmul.f32 %v598, %v760
        %v809 = vmul.f32 %v603, %v763
        %v810 = vmul.f32 %v608, %v766
        %v811 = vmul.f32 %v613, %v769
        %v812 = vmul.f32 %v618, %v772
        %v813 = vmul.f32 %v623, %v775
        %v814 = vmul.f32 %v628, %v778
        %v815 = vmul.f32 %v633, %v781
        %v816 = vmul.f32 %v638, %v784
        %v817 = vmul.f32 %v643, %v787
        %v818 = vmul.f32 %v648, %v790
        %v819 = vmul.f32 %v653, %v793
        %v820 = vmul.f32 %v658, %v796
        %v821 = vmul.f32 %v663, %v799
        %v822 = vmul.f32 %v668, %v802
        %v823 = vmul.f32 %v673, %v805
        %v824 = vpack.c.bf16 %v808, %v808
        %v825 = vpack.c.bf16 %v809, %v809
        %v826 = vpack.c.bf16 %v810, %v810
        %v827 = vpack.c.bf16 %v811, %v811
        %v828 = vpack.c.bf16 %v812, %v812
        %v829 = vpack.c.bf16 %v813, %v813
        %v830 = vpack.c.bf16 %v814, %v814
        %v831 = vpack.c.bf16 %v815, %v815
        %v832 = vpack.c.bf16 %v816, %v816
        %v833 = vpack.c.bf16 %v817, %v817
        %v834 = vpack.c.bf16 %v818, %v818
        %v835 = vpack.c.bf16 %v819, %v819
        %v836 = vpack.c.bf16 %v820, %v820
        %v837 = vpack.c.bf16 %v821, %v821
        %v838 = vpack.c.bf16 %v822, %v822
        %v839 = vpack.c.bf16 %v823, %v823
        %s840 = sshra.s32 %s807, 3
        %s841 = sand.u32 %s807, 7
        %s842 = smul.addr %s840, 4
        %s843 = scalar_lea.vmem [#allocation2], %s842
        %844 = vst [vmem:[%s843] sm:$0xf] %v824
        %845 = vst [vmem:[%s843 + $0x4] sm:$0xf] %v825
        %846 = vst [vmem:[%s843 + $0x8] sm:$0xf] %v826
        %847 = vst [vmem:[%s843 + $0xc] sm:$0xf] %v827
        %848 = vst [vmem:[%s843 + $0x10] sm:$0xf] %v828
        %849 = vst [vmem:[%s843 + $0x14] sm:$0xf] %v829
        %850 = vst [vmem:[%s843 + $0x18] sm:$0xf] %v830
        %851 = vst [vmem:[%s843 + $0x1c] sm:$0xf] %v831
        %852 = vst [vmem:[%s843 + $0x20] sm:$0xf] %v832
        %853 = vst [vmem:[%s843 + $0x24] sm:$0xf] %v833
        %854 = vst [vmem:[%s843 + $0x28] sm:$0xf] %v834
        %855 = vst [vmem:[%s843 + $0x2c] sm:$0xf] %v835
        %856 = vst [vmem:[%s843 + $0x30] sm:$0xf] %v836
        %857 = vst [vmem:[%s843 + $0x34] sm:$0xf] %v837
        %858 = vst [vmem:[%s843 + $0x38] sm:$0xf] %v838
        %859 = vst [vmem:[%s843 + $0x3c] sm:$0xf] %v839
      $region60: #{gcn_forward.1} parent=55 // pred_fallthru
        _
      %p860 = scmp.eq.s32.totalorder %s24, 1
      // Predicated region
      $region65: #{gcn_forward.1} parent=55 // pred_check
        %p861 = pneg %p860
      $region66: #{gcn_forward.1} parent=55 // pred_check_branch
        %863 = sbr.rel (%p861) target = $region68
      $region67: #{gcn_forward.1} parent=55 // pred_region
        %v864 = vld [vmem:[%s375] sm:$0xf]
        %v865 = vld [vmem:[%s375 + $0x4] sm:$0xf]
        %v866 = vld [vmem:[%s375 + $0x8] sm:$0xf]
        %v867 = vld [vmem:[%s375 + $0xc] sm:$0xf]
        %v868 = vld [vmem:[%s375 + $0x10] sm:$0xf]
        %v869 = vld [vmem:[%s375 + $0x14] sm:$0xf]
        %v870 = vld [vmem:[%s375 + $0x18] sm:$0xf]
        %v871 = vld [vmem:[%s375 + $0x1c] sm:$0xf]
        %v872 = vld [vmem:[%s375 + $0x20] sm:$0xf]
        %v873 = vld [vmem:[%s375 + $0x24] sm:$0xf]
        %v874 = vld [vmem:[%s375 + $0x28] sm:$0xf]
        %v875 = vld [vmem:[%s375 + $0x2c] sm:$0xf]
        %v876 = vld [vmem:[%s375 + $0x30] sm:$0xf]
        %v877 = vld [vmem:[%s375 + $0x34] sm:$0xf]
        %v878 = vld [vmem:[%s375 + $0x38] sm:$0xf]
        %v879 = vld [vmem:[%s375 + $0x3c] sm:$0xf]
        %v880 = vld [vmem:[#allocation2] sm:$0xf]
        %v881 = vld [vmem:[#allocation2 + $0x4] sm:$0xf]
        %v882 = vld [vmem:[#allocation2 + $0x8] sm:$0xf]
        %v883 = vld [vmem:[#allocation2 + $0xc] sm:$0xf]
        %v884 = vld [vmem:[#allocation2 + $0x10] sm:$0xf]
        %v885 = vld [vmem:[#allocation2 + $0x14] sm:$0xf]
        %v886 = vld [vmem:[#allocation2 + $0x18] sm:$0xf]
        %v887 = vld [vmem:[#allocation2 + $0x1c] sm:$0xf]
        %v888 = vld [vmem:[#allocation2 + $0x20] sm:$0xf]
        %v889 = vld [vmem:[#allocation2 + $0x24] sm:$0xf]
        %v890 = vld [vmem:[#allocation2 + $0x28] sm:$0xf]
        %v891 = vld [vmem:[#allocation2 + $0x2c] sm:$0xf]
        %v892 = vld [vmem:[#allocation2 + $0x30] sm:$0xf]
        %v893 = vld [vmem:[#allocation2 + $0x34] sm:$0xf]
        %v894 = vld [vmem:[#allocation2 + $0x38] sm:$0xf]
        %v895 = vld [vmem:[#allocation2 + $0x3c] sm:$0xf]
        %v912 = vunpack.c.l.b16 %v864
        %v913 = vunpack.c.l.b16 %v865
        %v914 = vunpack.c.l.b16 %v866
        %v915 = vunpack.c.l.b16 %v867
        %v916 = vunpack.c.l.b16 %v868
        %v917 = vunpack.c.l.b16 %v869
        %v918 = vunpack.c.l.b16 %v870
        %v919 = vunpack.c.l.b16 %v871
        %v920 = vunpack.c.l.b16 %v872
        %v921 = vunpack.c.l.b16 %v873
        %v922 = vunpack.c.l.b16 %v874
        %v923 = vunpack.c.l.b16 %v875
        %v924 = vunpack.c.l.b16 %v876
        %v925 = vunpack.c.l.b16 %v877
        %v926 = vunpack.c.l.b16 %v878
        %v927 = vunpack.c.l.b16 %v879
        %v928 = vpack.c.b16 %v913, %v912
        %v929 = vpack.c.b16 %v915, %v914
        %v930 = vpack.c.b16 %v917, %v916
        %v931 = vpack.c.b16 %v919, %v918
        %v932 = vpack.c.b16 %v921, %v920
        %v933 = vpack.c.b16 %v923, %v922
        %v934 = vpack.c.b16 %v925, %v924
        %v935 = vpack.c.b16 %v927, %v926
        %v960 = vunpack.c.l.b16 %v880
        %v961 = vunpack.c.l.b16 %v881
        %v962 = vunpack.c.l.b16 %v882
        %v963 = vunpack.c.l.b16 %v883
        %v964 = vunpack.c.l.b16 %v884
        %v965 = vunpack.c.l.b16 %v885
        %v966 = vunpack.c.l.b16 %v886
        %v967 = vunpack.c.l.b16 %v887
        %v968 = vunpack.c.l.b16 %v888
        %v969 = vunpack.c.l.b16 %v889
        %v970 = vunpack.c.l.b16 %v890
        %v971 = vunpack.c.l.b16 %v891
        %v972 = vunpack.c.l.b16 %v892
        %v973 = vunpack.c.l.b16 %v893
        %v974 = vunpack.c.l.b16 %v894
        %v975 = vunpack.c.l.b16 %v895
        %v976 = vpack.c.b16 %v961, %v960
        %v977 = vpack.c.b16 %v963, %v962
        %v978 = vpack.c.b16 %v965, %v964
        %v979 = vpack.c.b16 %v967, %v966
        %v980 = vpack.c.b16 %v969, %v968
        %v981 = vpack.c.b16 %v971, %v970
        %v982 = vpack.c.b16 %v973, %v972
        %v983 = vpack.c.b16 %v975, %v974
        %992 = vmatpush.bf16.msra.mxu0 %v983
        %993 = vmatpush.bf16.msra.mxu0 %v982
        %994 = vmatpush.bf16.msra.mxu0 %v981
        %995 = vmatpush.bf16.msra.mxu0 %v980
        %996 = vmatpush.bf16.msra.mxu0 %v979
        %997 = vmatpush.bf16.msra.mxu0 %v978
        %998 = vmatpush.bf16.msra.mxu0 %v977
        %999 = vmatpush.bf16.msra.mxu0 %v976
        %1000 = vmatmul.bf16.gmra.mxu0 %v928
        %v1001 = vpop.f32.mrf.mxu0
        %v1002 = vadd.f32 0.0, %v1001
        %v1003 = vpop.f32.mrf.mxu0
        %v1004 = vadd.f32 0.0, %v1003
        %1005 = vmatmul.bf16.gmra.mxu0 %v929
        %v1006 = vpop.f32.mrf.mxu0
        %v1007 = vadd.f32 0.0, %v1006
        %v1008 = vpop.f32.mrf.mxu0
        %v1009 = vadd.f32 0.0, %v1008
        %1010 = vmatmul.bf16.gmra.mxu0 %v930
        %v1011 = vpop.f32.mrf.mxu0
        %v1012 = vadd.f32 0.0, %v1011
        %v1013 = vpop.f32.mrf.mxu0
        %v1014 = vadd.f32 0.0, %v1013
        %1015 = vmatmul.bf16.gmra.mxu0 %v931
        %v1016 = vpop.f32.mrf.mxu0
        %v1017 = vadd.f32 0.0, %v1016
        %v1018 = vpop.f32.mrf.mxu0
        %v1019 = vadd.f32 0.0, %v1018
        %1020 = vmatmul.bf16.gmra.mxu0 %v932
        %v1021 = vpop.f32.mrf.mxu0
        %v1022 = vadd.f32 0.0, %v1021
        %v1023 = vpop.f32.mrf.mxu0
        %v1024 = vadd.f32 0.0, %v1023
        %1025 = vmatmul.bf16.gmra.mxu0 %v933
        %v1026 = vpop.f32.mrf.mxu0
        %v1027 = vadd.f32 0.0, %v1026
        %v1028 = vpop.f32.mrf.mxu0
        %v1029 = vadd.f32 0.0, %v1028
        %1030 = vmatmul.bf16.gmra.mxu0 %v934
        %v1031 = vpop.f32.mrf.mxu0
        %v1032 = vadd.f32 0.0, %v1031
        %v1033 = vpop.f32.mrf.mxu0
        %v1034 = vadd.f32 0.0, %v1033
        %1035 = vmatmul.bf16.gmra.mxu0 %v935
        %v1036 = vpop.f32.mrf.mxu0
        %v1037 = vadd.f32 0.0, %v1036
        %v1038 = vpop.f32.mrf.mxu0
        %v1039 = vadd.f32 0.0, %v1038
        %1040 = vdwg.mxu0
        %1042 = vset.pattern.permute.xlu0 0
        %1043 = vperm.xlu0 %1042, %v392
        %v1044 = vpop.permute.xlu0 %1043
        %1047 = vset.pattern.permute.xlu0 0
        %1048 = vperm.xlu0 %1047, %v393
        %v1049 = vpop.permute.xlu0 %1048
        %1052 = vset.pattern.permute.xlu0 0
        %1053 = vperm.xlu0 %1052, %v394
        %v1054 = vpop.permute.xlu0 %1053
        %1057 = vset.pattern.permute.xlu0 0
        %1058 = vperm.xlu0 %1057, %v395
        %v1059 = vpop.permute.xlu0 %1058
        %1062 = vset.pattern.permute.xlu0 0
        %1063 = vperm.xlu0 %1062, %v396
        %v1064 = vpop.permute.xlu0 %1063
        %1067 = vset.pattern.permute.xlu0 0
        %1068 = vperm.xlu0 %1067, %v397
        %v1069 = vpop.permute.xlu0 %1068
        %1072 = vset.pattern.permute.xlu0 0
        %1073 = vperm.xlu0 %1072, %v398
        %v1074 = vpop.permute.xlu0 %1073
        %1077 = vset.pattern.permute.xlu0 0
        %1078 = vperm.xlu0 %1077, %v399
        %v1079 = vpop.permute.xlu0 %1078
        %1082 = vset.pattern.permute.xlu0 0
        %1083 = vperm.xlu0 %1082, %v400
        %v1084 = vpop.permute.xlu0 %1083
        %1087 = vset.pattern.permute.xlu0 0
        %1088 = vperm.xlu0 %1087, %v401
        %v1089 = vpop.permute.xlu0 %1088
        %1092 = vset.pattern.permute.xlu0 0
        %1093 = vperm.xlu0 %1092, %v402
        %v1094 = vpop.permute.xlu0 %1093
        %1097 = vset.pattern.permute.xlu0 0
        %1098 = vperm.xlu0 %1097, %v403
        %v1099 = vpop.permute.xlu0 %1098
        %1102 = vset.pattern.permute.xlu0 0
        %1103 = vperm.xlu0 %1102, %v404
        %v1104 = vpop.permute.xlu0 %1103
        %1107 = vset.pattern.permute.xlu0 0
        %1108 = vperm.xlu0 %1107, %v405
        %v1109 = vpop.permute.xlu0 %1108
        %1112 = vset.pattern.permute.xlu0 0
        %1113 = vperm.xlu0 %1112, %v406
        %v1114 = vpop.permute.xlu0 %1113
        %1117 = vset.pattern.permute.xlu0 0
        %1118 = vperm.xlu0 %1117, %v407
        %v1119 = vpop.permute.xlu0 %1118
        %v1121 = vmul.f32 %v1044, %v1002
        %v1122 = vmul.f32 %v1049, %v1004
        %v1123 = vmul.f32 %v1054, %v1007
        %v1124 = vmul.f32 %v1059, %v1009
        %v1125 = vmul.f32 %v1064, %v1012
        %v1126 = vmul.f32 %v1069, %v1014
        %v1127 = vmul.f32 %v1074, %v1017
        %v1128 = vmul.f32 %v1079, %v1019
        %v1129 = vmul.f32 %v1084, %v1022
        %v1130 = vmul.f32 %v1089, %v1024
        %v1131 = vmul.f32 %v1094, %v1027
        %v1132 = vmul.f32 %v1099, %v1029
        %v1133 = vmul.f32 %v1104, %v1032
        %v1134 = vmul.f32 %v1109, %v1034
        %v1135 = vmul.f32 %v1114, %v1037
        %v1136 = vmul.f32 %v1119, %v1039
        %v1138 = vperm.slane %v408, 0
        %v1140 = vadd.f32 %v1121, %v1138
        %v1141 = vadd.f32 %v1122, %v1138
        %v1142 = vadd.f32 %v1123, %v1138
        %v1143 = vadd.f32 %v1124, %v1138
        %v1144 = vadd.f32 %v1125, %v1138
        %v1145 = vadd.f32 %v1126, %v1138
        %v1146 = vadd.f32 %v1127, %v1138
        %v1147 = vadd.f32 %v1128, %v1138
        %v1148 = vadd.f32 %v1129, %v1138
        %v1149 = vadd.f32 %v1130, %v1138
        %v1150 = vadd.f32 %v1131, %v1138
        %v1151 = vadd.f32 %v1132, %v1138
        %v1152 = vadd.f32 %v1133, %v1138
        %v1153 = vadd.f32 %v1134, %v1138
        %v1154 = vadd.f32 %v1135, %v1138
        %v1155 = vadd.f32 %v1136, %v1138
        %v1156 = vmax.f32 %v1140, 0.0
        %v1157 = vmax.f32 %v1141, 0.0
        %v1158 = vmax.f32 %v1142, 0.0
        %v1159 = vmax.f32 %v1143, 0.0
        %v1160 = vmax.f32 %v1144, 0.0
        %v1161 = vmax.f32 %v1145, 0.0
        %v1162 = vmax.f32 %v1146, 0.0
        %v1163 = vmax.f32 %v1147, 0.0
        %v1164 = vmax.f32 %v1148, 0.0
        %v1165 = vmax.f32 %v1149, 0.0
        %v1166 = vmax.f32 %v1150, 0.0
        %v1167 = vmax.f32 %v1151, 0.0
        %v1168 = vmax.f32 %v1152, 0.0
        %v1169 = vmax.f32 %v1153, 0.0
        %v1170 = vmax.f32 %v1154, 0.0
        %v1171 = vmax.f32 %v1155, 0.0
        %v1172 = vld [vmem:[#allocation3] sm:$0xff]
        %v1173 = vld [vmem:[%s390] sm:$0xf]
        %v1174 = vpack.c.bf16 %v1157, %v1156
        %v1175 = vpack.c.bf16 %v1159, %v1158
        %v1176 = vpack.c.bf16 %v1161, %v1160
        %v1177 = vpack.c.bf16 %v1163, %v1162
        %v1178 = vpack.c.bf16 %v1165, %v1164
        %v1179 = vpack.c.bf16 %v1167, %v1166
        %v1180 = vpack.c.bf16 %v1169, %v1168
        %v1181 = vpack.c.bf16 %v1171, %v1170
        %1182 = vmatpush.bf16.msra.mxu0 %v1181
        %1183 = vmatpush.bf16.msra.mxu0 %v1180
        %1184 = vmatpush.bf16.msra.mxu0 %v1179
        %1185 = vmatpush.bf16.msra.mxu0 %v1178
        %1186 = vmatpush.bf16.msra.mxu0 %v1177
        %1187 = vmatpush.bf16.msra.mxu0 %v1176
        %1188 = vmatpush.bf16.msra.mxu0 %v1175
        %1189 = vmatpush.bf16.msra.mxu0 %v1174
        %1190 = vmatmul.bf16.gmra.mxu0 %v1173
        %v1191 = vpop.f32.mrf.mxu0
        %v1192 = vadd.f32 0.0, %v1191
        %v1193 = vpop.f32.mrf.mxu0
        %1194 = vdwg.mxu0
        %v1195 = vadd.f32 %v1172, %v1192
        %1196 = vst [vmem:[#allocation3] sm:$0xff] %v1195
        %p1197 = scmp.eq.s32.totalorder %s25, 0
        // Predicated region
        $region69: #{gcn_forward.1} parent=67 // pred_check
          %p1198 = pneg %p1197
        $region70: #{gcn_forward.1} parent=67 // pred_check_branch
          %1200 = sbr.rel (%p1198) target = $region72
        $region71: #{gcn_forward.1} parent=67 // pred_region
          %v1201 = vld [vmem:[#allocation3] sm:$0xff]
          %v1202 = vld [vmem:[%s6] sm:$0xff]
          %1204 = vset.pattern.permute.xlu0 0
          %1205 = vperm.xlu0 %1204, %v1202
          %v1206 = vpop.permute.xlu0 %1205
          %v1208 = vmul.f32 %v1201, %v1206
          %v1209 = vld [vmem:[%s7] sm:$0xff]
          %v1210 = vld [vmem:[%s7 + $0x8] sm:$0xff]
          %v1211 = vld [vmem:[%s7 + $0x10] sm:$0xff]
          %v1212 = vld [vmem:[%s7 + $0x18] sm:$0xff]
          %v1213 = vld [vmem:[%s7 + $0x20] sm:$0xff]
          %v1214 = vld [vmem:[%s7 + $0x28] sm:$0xff]
          %v1215 = vld [vmem:[%s7 + $0x30] sm:$0xff]
          %v1216 = vld [vmem:[%s7 + $0x38] sm:$0xff]
          %v1217 = vld [vmem:[%s7 + $0x40] sm:$0xff]
          %v1218 = vld [vmem:[%s7 + $0x48] sm:$0xff]
          %v1219 = vld [vmem:[%s7 + $0x50] sm:$0xff]
          %v1220 = vld [vmem:[%s7 + $0x58] sm:$0xff]
          %v1221 = vld [vmem:[%s7 + $0x60] sm:$0xff]
          %v1222 = vld [vmem:[%s7 + $0x68] sm:$0xff]
          %v1223 = vld [vmem:[%s7 + $0x70] sm:$0xff]
          %v1224 = vld [vmem:[%s7 + $0x78] sm:$0xff]
          %v1225 = vld [vmem:[%s8] sm:$0x1]
          %v1227 = vperm.slane %v1225, 0
          %1229 = vmatpush.msra.mxu0 %v1224
          %1230 = vmatpush.msra.mxu0 %v1223
          %1231 = vmatpush.msra.mxu0 %v1222
          %1232 = vmatpush.msra.mxu0 %v1221
          %1233 = vmatpush.msra.mxu0 %v1220
          %1234 = vmatpush.msra.mxu0 %v1219
          %1235 = vmatpush.msra.mxu0 %v1218
          %1236 = vmatpush.msra.mxu0 %v1217
          %1237 = vmatpush.msra.mxu0 %v1216
          %1238 = vmatpush.msra.mxu0 %v1215
          %1239 = vmatpush.msra.mxu0 %v1214
          %1240 = vmatpush.msra.mxu0 %v1213
          %1241 = vmatpush.msra.mxu0 %v1212
          %1242 = vmatpush.msra.mxu0 %v1211
          %1243 = vmatpush.msra.mxu0 %v1210
          %1244 = vmatpush.msra.mxu0 %v1209
          %1245 = vmatmul.f32.gmra.mxu0 %v1208
          %v1246 = vpop.f32.mrf.mxu0
          %v1247 = vadd.f32 %v1227, %v1246
          %1248 = vdwg.mxu0
          %1249 = vst [vmem:[%s9] sm:$0xff] %v1247
        $region72: #{gcn_forward.1} parent=67 // pred_fallthru
          _
      $region68: #{gcn_forward.1} parent=55 // pred_fallthru
        _
      // Predicated region
      $region73: #{gcn_forward.1} parent=55 // pred_check
        %p1250 = pneg %p256
      $region74: #{gcn_forward.1} parent=55 // pred_check_branch
        %1252 = sbr.rel (%p1250) target = $region76
      $region75: #{gcn_forward.1} parent=55 // pred_region
        _
      $region76: #{gcn_forward.1} parent=55 // pred_fallthru
        _
      // Predicated region
      $region77: #{gcn_forward.1} parent=55 // pred_check
        %p1253 = pneg %p256
      $region78: #{gcn_forward.1} parent=55 // pred_check_branch
        %1255 = sbr.rel (%p1253) target = $region80
      $region79: #{gcn_forward.1} parent=55 // pred_region
        _
      $region80: #{gcn_forward.1} parent=55 // pred_fallthru
        _
    $region56: #{gcn_forward.1} parent=5 // pred_fallthru
      _
    %p1256 = scmp.le.s32.totalorder 2, %s15
    // Predicated region
    $region81: #{gcn_forward.1} parent=5 // pred_check
      %p1257 = pneg %p1256
    $region82: #{gcn_forward.1} parent=5 // pred_check_branch
      %1259 = sbr.rel (%p1257) target = $region84
    $region83: #{gcn_forward.1} parent=5 // pred_region
      %s1260 = ssub.s32 %s15, 2
    $region84: #{gcn_forward.1} parent=5 // pred_fallthru
      _
  $region6: #{gcn_forward.1} parent=0 // loop_footer
    %s19 = sadd.s32 1, %s15
  $region7: #{gcn_forward.1} parent=0 // loop_footer_branch
    %14 = sbr.rel target = $region3
  $region8: #{gcn_forward.1} parent=0 // loop_exit
    _

</llo_original>
